<compile_context>
chip_gen: v7x
topology: tpu7x:2x2x1
jax: 0.10.0
libtpu: 0.0.40
codegen_flags: <defaults>
</compile_context>

<pallas_src>
import functools

import jax
import jax.numpy as jnp
from jax import lax
from jax.experimental import pallas as pl
from jax.experimental.pallas import tpu as pltpu


# ----------------------------------------------------------------------------
# Pallas kernels
# ----------------------------------------------------------------------------

def _conv3x3_kernel(x_ref, w_ref, b_ref, o_ref, xpad_ref, *, H, W, apply_relu):
    """3x3 conv (stride 1, pad 1) + bias (+ ReLU) for one batch element.

    x_ref   : (1, H, W, Cin)   bf16  input tile
    w_ref   : (9, Cin, Cout)   bf16  3x3 taps flattened (t = dy*3 + dx)
    b_ref   : (1, Cout)        f32
    o_ref   : (1, H, W, Cout)  f32
    xpad_ref: (H+2, W+2, Cin)  f32   VMEM scratch (zero halo; no wrapper-side jnp.pad)
    """
    Cin = x_ref.shape[-1]
    Cout = w_ref.shape[-1]
    # In-kernel halo handling: zero the scratch, copy interior.
    xpad_ref[...] = jnp.zeros_like(xpad_ref)
    xpad_ref[1:H + 1, 1:W + 1, :] = x_ref[0].astype(xpad_ref.dtype)
    acc = jnp.zeros((H * W, Cout), jnp.float32)
    for t in range(9):                       # unrolled at trace time
        dy, dx = t // 3, t % 3
        xs = xpad_ref[dy:dy + H, dx:dx + W, :].reshape(H * W, Cin)
        acc = acc + jnp.dot(xs.astype(jnp.bfloat16), w_ref[t],
                            preferred_element_type=jnp.float32)
    acc = acc + b_ref[...]
    if apply_relu:
        acc = jnp.maximum(acc, 0.0)
    o_ref[...] = acc.reshape(1, H, W, Cout).astype(o_ref.dtype)


def _fpn_level_kernel(x_ref, skip_ref, wl_ref, bl_ref, wo_ref, bo_ref, o_ref,
                      tpad_ref, *, H, W):
    """Fused FPN level: (1x1 lateral conv + bias + skip add) -> 3x3 conv + bias + ReLU.

    x_ref   : (1, H, W, Cin)  bf16  backbone feature
    skip_ref: (1, H, W, C)    f32   nearest-upsampled y from the coarser level
    wl_ref  : (Cin, C)        bf16  lateral 1x1 weight
    bl_ref  : (1, C)          f32
    wo_ref  : (9, C, C)       bf16  3x3 output-conv taps (t = dy*3 + dx)
    bo_ref  : (1, C)          f32
    o_ref   : (1, H, W, C)    f32
    tpad_ref: (H+2, W+2, C)   f32   VMEM scratch: zero-halo padded fused intermediate
    """
    Cin = x_ref.shape[-1]
    C = wl_ref.shape[-1]
    # lateral 1x1 conv + bias + FPN skip (cur_fpn + interpolate(y)) -- all in VMEM
    xs = x_ref[0].reshape(H * W, Cin)
    t = jnp.dot(xs, wl_ref[...], preferred_element_type=jnp.float32)
    t = t + bl_ref[...] + skip_ref[0].reshape(H * W, C)
    # zero-halo padded intermediate stays in VMEM scratch (no HBM round trip, no jnp.pad)
    tpad_ref[...] = jnp.zeros_like(tpad_ref)
    tpad_ref[1:H + 1, 1:W + 1, :] = t.reshape(H, W, C)
    # 3x3 output conv + bias + ReLU
    acc = jnp.zeros((H * W, C), jnp.float32)
    for k in range(9):                       # unrolled at trace time
        dy, dx = k // 3, k % 3
        ts = tpad_ref[dy:dy + H, dx:dx + W, :].reshape(H * W, C)
        acc = acc + jnp.dot(ts.astype(jnp.bfloat16), wo_ref[k],
                            preferred_element_type=jnp.float32)
    acc = jnp.maximum(acc + bo_ref[...], 0.0)
    o_ref[...] = acc.reshape(1, H, W, C).astype(o_ref.dtype)


# ----------------------------------------------------------------------------
# Wrappers
# ----------------------------------------------------------------------------

def conv3x3(x_nhwc, w, b, *, relu):
    """3x3 conv, stride 1, padding 1, bias, optional ReLU.  w: (3,3,Cin,Cout)."""
    N, H, W, Cin = x_nhwc.shape
    Cout = w.shape[-1]
    kern = functools.partial(_conv3x3_kernel, H=H, W=W, apply_relu=relu)
    grid_spec = pltpu.PrefetchScalarGridSpec(
        num_scalar_prefetch=0,
        grid=(N,),
        in_specs=[
            pl.BlockSpec((1, H, W, Cin), lambda n: (n, 0, 0, 0)),
            pl.BlockSpec((9, Cin, Cout), lambda n: (0, 0, 0)),
            pl.BlockSpec((1, Cout), lambda n: (0, 0)),
        ],
        out_specs=pl.BlockSpec((1, H, W, Cout), lambda n: (n, 0, 0, 0)),
        scratch_shapes=[pltpu.VMEM((H + 2, W + 2, Cin), jnp.float32)],
    )
    return pl.pallas_call(
        kern,
        out_shape=jax.ShapeDtypeStruct((N, H, W, Cout), jnp.float32),
        grid_spec=grid_spec,
        compiler_params=pltpu.CompilerParams(dimension_semantics=("parallel",)),
    )(x_nhwc.astype(jnp.bfloat16),
      w.reshape(9, Cin, Cout).astype(jnp.bfloat16),
      b.reshape(1, Cout).astype(jnp.float32))


def fpn_level(x_nhwc, skip_nhwc, wl, bl, wo, bo):
    """Fused FPN level: conv1x1(x)+bias+skip -> conv3x3+bias+ReLU in one pallas_call."""
    N, H, W, Cin = x_nhwc.shape
    C = wl.shape[-1]
    kern = functools.partial(_fpn_level_kernel, H=H, W=W)
    grid_spec = pltpu.PrefetchScalarGridSpec(
        num_scalar_prefetch=0,
        grid=(N,),
        in_specs=[
            pl.BlockSpec((1, H, W, Cin), lambda n: (n, 0, 0, 0)),
            pl.BlockSpec((1, H, W, C), lambda n: (n, 0, 0, 0)),
            pl.BlockSpec((Cin, C), lambda n: (0, 0)),
            pl.BlockSpec((1, C), lambda n: (0, 0)),
            pl.BlockSpec((9, C, C), lambda n: (0, 0, 0)),
            pl.BlockSpec((1, C), lambda n: (0, 0)),
        ],
        out_specs=pl.BlockSpec((1, H, W, C), lambda n: (n, 0, 0, 0)),
        scratch_shapes=[pltpu.VMEM((H + 2, W + 2, C), jnp.float32)],
    )
    return pl.pallas_call(
        kern,
        out_shape=jax.ShapeDtypeStruct((N, H, W, C), jnp.float32),
        grid_spec=grid_spec,
        compiler_params=pltpu.CompilerParams(dimension_semantics=("parallel",)),
    )(x_nhwc.astype(jnp.bfloat16),
      skip_nhwc.astype(jnp.float32),
      wl.astype(jnp.bfloat16),
      bl.reshape(1, C).astype(jnp.float32),
      wo.reshape(9, C, C).astype(jnp.bfloat16),
      bo.reshape(1, C).astype(jnp.float32))


# ----------------------------------------------------------------------------
# Glue: nearest-neighbour resize (matches F.interpolate(..., mode='nearest'))
# ----------------------------------------------------------------------------

def nearest_resize(y_nhwc, size):
    N, H, W, C = y_nhwc.shape
    Ho, Wo = size
    rows = (jnp.arange(Ho) * H) // Ho
    cols = (jnp.arange(Wo) * W) // Wo
    return y_nhwc[:, rows][:, :, cols]


# ----------------------------------------------------------------------------
# BasePixelDecoder (forward_features) in JAX + Pallas
# ----------------------------------------------------------------------------

def _init_w(key, shape, fan_in):
    # mirrors c2_xavier_fill weight init: kaiming_uniform_(a=1) -> bound = sqrt(3/fan_in)
    bound = (3.0 / fan_in) ** 0.5
    return jax.random.uniform(key, shape, jnp.float32, -bound, bound)


class BasePixelDecoderPallas:
    def __init__(self, input_shape, conv_dim, mask_dim, key, *, bias_scale=0.0):
        # input_shape: dict name -> (channels, stride)
        # bias_scale=0.0 matches c2_xavier_fill (constant_(bias, 0)); the test below
        # passes a non-zero value so the kernel bias path is validated numerically.
        items = sorted(input_shape.items(), key=lambda kv: kv[1][1])
        self.in_features = [k for k, _ in items]
        feature_channels = [v[0] for _, v in items]
        self.conv_dim = conv_dim
        self.mask_dim = mask_dim
        self.maskformer_num_feature_levels = 3

        n = len(items)
        keys = jax.random.split(key, 4 * n + 2)
        ki = 0

        def _bias(k, cout):
            if bias_scale == 0.0:
                return jnp.zeros((cout,), jnp.float32)
            return bias_scale * jax.random.uniform(k, (cout,), jnp.float32, -1.0, 1.0)

        lateral, output = [], []
        for idx, cin in enumerate(feature_channels):
            if idx == n - 1:
                wo = _init_w(keys[ki], (3, 3, cin, conv_dim), cin * 9); ki += 1
                bo = _bias(keys[ki], conv_dim); ki += 1
                lateral.append(None)
                output.append((wo, bo))
            else:
                wl = _init_w(keys[ki], (cin, conv_dim), cin); ki += 1
                bl = _bias(keys[ki], conv_dim); ki += 1
                wo = _init_w(keys[ki], (3, 3, conv_dim, conv_dim), conv_dim * 9); ki += 1
                bo = _bias(keys[ki], conv_dim); ki += 1
                lateral.append((wl, bl))
                output.append((wo, bo))
        # stored coarsest-first, like the PyTorch module ([::-1])
        self.lateral_convs = lateral[::-1]
        self.output_convs = output[::-1]
        self.mask_w = _init_w(keys[ki], (3, 3, conv_dim, mask_dim), conv_dim * 9); ki += 1
        self.mask_b = _bias(keys[ki], mask_dim)

    def forward_features(self, features):
        """features: dict name -> NCHW array.  Returns (mask_features NCHW, None, [NCHW,...])."""
        multi_scale_features = []
        y = None
        # the pyramid stays NHWC end-to-end; only module-boundary tensors get transposed
        for idx, f in enumerate(self.in_features[::-1]):    # coarsest first
            x = jnp.transpose(features[f], (0, 2, 3, 1))     # NCHW -> NHWC (once per input)
            lateral = self.lateral_convs[idx]
            wo, bo = self.output_convs[idx]
            if lateral is None:
                y = conv3x3(x, wo, bo, relu=True)
            else:
                wl, bl = lateral
                up = nearest_resize(y, (x.shape[1], x.shape[2]))
                y = fpn_level(x, up, wl, bl, wo, bo)         # fused 1x1 + skip + 3x3 + ReLU
            if len(multi_scale_features) < self.maskformer_num_feature_levels:
                multi_scale_features.append(jnp.transpose(y, (0, 3, 1, 2)))
        mask = conv3x3(y, self.mask_w, self.mask_b, relu=False)
        return jnp.transpose(mask, (0, 3, 1, 2)), None, multi_scale_features


# ----------------------------------------------------------------------------
# Pure-JAX reference (same bf16-operand / f32-accumulate contract as the kernels)
# ----------------------------------------------------------------------------

def _ref_conv(x_nhwc, w_hwio, b, relu):
    y = lax.conv_general_dilated(
        x_nhwc.astype(jnp.bfloat16), w_hwio.astype(jnp.bfloat16), (1, 1), "SAME",
        dimension_numbers=("NHWC", "HWIO", "NHWC"),
        preferred_element_type=jnp.float32)
    y = y + b
    return jnp.maximum(y, 0.0) if relu else y


def ref_forward(dec, features):
    multi_scale = []
    y = None
    for idx, f in enumerate(dec.in_features[::-1]):
        x = jnp.transpose(features[f], (0, 2, 3, 1))
        lateral = dec.lateral_convs[idx]
        wo, bo = dec.output_convs[idx]
        if lateral is None:
            y = _ref_conv(x, wo, bo, True)
        else:
            wl, bl = lateral
            up = nearest_resize(y, (x.shape[1], x.shape[2]))
            cur = _ref_conv(x, wl.reshape(1, 1, *wl.shape), bl, False)
            y = _ref_conv(cur + up, wo, bo, True)
        if len(multi_scale) < dec.maskformer_num_feature_levels:
            multi_scale.append(jnp.transpose(y, (0, 3, 1, 2)))
    mask = _ref_conv(y, dec.mask_w, dec.mask_b, False)
    return jnp.transpose(mask, (0, 3, 1, 2)), None, multi_scale


# ----------------------------------------------------------------------------
# Main
# ----------------------------------------------------------------------------

if __name__ == "__main__":
    key = jax.random.PRNGKey(0)
    k_param, k_r2, k_r3, k_r4, k_r5 = jax.random.split(key, 5)

    # name -> (channels, stride); image resolution 64x64 implied
    input_shape = {
        "res2": (8, 4),
        "res3": (16, 8),
        "res4": (24, 16),
        "res5": (32, 32),
    }
    N = 2
    features = {
        "res2": jax.random.normal(k_r2, (N, 8, 16, 16), jnp.float32),
        "res3": jax.random.normal(k_r3, (N, 16, 8, 8), jnp.float32),
        "res4": jax.random.normal(k_r4, (N, 24, 4, 4), jnp.float32),
        "res5": jax.random.normal(k_r5, (N, 32, 2, 2), jnp.float32),
    }

    # bias_scale=0.1: non-zero biases so the kernel bias path is numerically exercised
    # (c2_xavier_fill zero-inits biases; pass bias_scale=0.0 to match PyTorch exactly).
    dec = BasePixelDecoderPallas(input_shape, conv_dim=32, mask_dim=16, key=k_param,
                                 bias_scale=0.1)

    mask_feats, transformer_feats, multi_scale = dec.forward_features(features)
    mask_feats = jax.block_until_ready(mask_feats)
    multi_scale = [jax.block_until_ready(m) for m in multi_scale]

    # sanity: shapes
    assert mask_feats.shape == (N, 16, 16, 16)            # (N, mask_dim, H_res2, W_res2)
    assert transformer_feats is None
    assert len(multi_scale) == 3
    assert multi_scale[0].shape == (N, 32, 2, 2)           # res5 level
    assert multi_scale[1].shape == (N, 32, 4, 4)           # res4 level
    assert multi_scale[2].shape == (N, 32, 8, 8)           # res3 level

    # numerical check against a pure-JAX reference with the same matmul precision
    ref_mask, _, ref_ms = ref_forward(dec, features)
    assert jnp.allclose(mask_feats, ref_mask, atol=2e-2, rtol=2e-2)
    for a, b in zip(multi_scale, ref_ms):
        assert jnp.allclose(a, b, atol=2e-2, rtol=2e-2)

    print("KERNEL_OK")
</pallas_src>

<mosaic_0001>
module attributes {stable_mosaic.version = 11 : i64} {
  func.func @_conv3x3_kernel(%arg0: i32, %arg1: memref<1x2x2x32xbf16, #tpu.memory_space<vmem>>, %arg2: memref<9x32x32xbf16, #tpu.memory_space<vmem>>, %arg3: memref<1x32xf32, #tpu.memory_space<vmem>>, %arg4: memref<1x2x2x32xf32, #tpu.memory_space<vmem>>, %arg5: memref<4x4x32xf32, #tpu.memory_space<vmem>>) attributes {dimension_semantics = [#tpu.dimension_semantics<parallel>], iteration_bounds = array<i64: 2>, scalar_prefetch = 0 : i64, scratch_operands = 1 : i64, tpu.core_type = #tpu.core_type<tc>, window_params = [{transform_indices = @transform_0, window_bounds = array<i64: 1, 2, 2, 32>}, {pipeline_mode = #tpu.pipeline_mode<synchronous>, transform_indices = @transform_1, window_bounds = array<i64: 9, 32, 32>}, {pipeline_mode = #tpu.pipeline_mode<synchronous>, transform_indices = @transform_2, window_bounds = array<i64: 1, 32>}, {transform_indices = @transform_3, window_bounds = array<i64: 1, 2, 2, 32>}]} {
    %cst = arith.constant 0.000000e+00 : f32
    %0 = vector.broadcast %cst : f32 to vector<4x4x32xf32>
    %c0 = arith.constant 0 : index
    %c0_0 = arith.constant 0 : index
    %c0_1 = arith.constant 0 : index
    %1 = vector.load %arg5[%c0, %c0_0, %c0_1] : memref<4x4x32xf32, #tpu.memory_space<vmem>>, vector<4x4x32xf32>
    tpu.vector_store %arg5[%c0, %c0_0, %c0_1], %0 {strides = array<i32>} : memref<4x4x32xf32, #tpu.memory_space<vmem>>, vector<4x4x32xf32>,
    %c0_2 = arith.constant 0 : index
    %c0_3 = arith.constant 0 : index
    %c0_4 = arith.constant 0 : index
    %c0_5 = arith.constant 0 : index
    %2 = vector.load %arg1[%c0_2, %c0_3, %c0_4, %c0_5] : memref<1x2x2x32xbf16, #tpu.memory_space<vmem>>, vector<1x2x2x32xbf16>
    %3 = vector.shape_cast %2 : vector<1x2x2x32xbf16> to vector<2x2x32xbf16>
    %4 = arith.extf %3 : vector<2x2x32xbf16> to vector<2x2x32xf32>
    %c1 = arith.constant 1 : index
    %c1_6 = arith.constant 1 : index
    %c0_7 = arith.constant 0 : index
    %5 = vector.load %arg5[%c1, %c1_6, %c0_7] : memref<4x4x32xf32, #tpu.memory_space<vmem>>, vector<2x2x32xf32>
    tpu.vector_store %arg5[%c1, %c1_6, %c0_7], %4 {strides = array<i32>} : memref<4x4x32xf32, #tpu.memory_space<vmem>>, vector<2x2x32xf32>,
    %cst_8 = arith.constant 0.000000e+00 : f32
    %6 = vector.broadcast %cst_8 : f32 to vector<4x32xf32>
    %c0_9 = arith.constant 0 : index
    %c0_10 = arith.constant 0 : index
    %c0_11 = arith.constant 0 : index
    %7 = vector.load %arg5[%c0_9, %c0_10, %c0_11] : memref<4x4x32xf32, #tpu.memory_space<vmem>>, vector<2x2x32xf32>
    %8 = vector.shape_cast %7 : vector<2x2x32xf32> to vector<4x32xf32>
    %9 = arith.truncf %8 : vector<4x32xf32> to vector<4x32xbf16>
    %c0_12 = arith.constant 0 : index
    %c0_13 = arith.constant 0 : index
    %c0_14 = arith.constant 0 : index
    %10 = vector.load %arg2[%c0_12, %c0_13, %c0_14] : memref<9x32x32xbf16, #tpu.memory_space<vmem>>, vector<1x32x32xbf16>
    %11 = vector.shape_cast %10 : vector<1x32x32xbf16> to vector<32x32xbf16>
    %cst_15 = arith.constant dense<0.000000e+00> : vector<4x32xf32>
    %12 = tpu.matmul %9, %11, %cst_15 {dimension_numbers = #tpu.dot_dimension_numbers<[1], [0], [0], [1], [0, 0, 1, 1], [], []>} : vector<4x32xbf16>, vector<32x32xbf16>, vector<4x32xf32> -> vector<4x32xf32>
    %13 = arith.addf %6, %12 : vector<4x32xf32>
    %c0_16 = arith.constant 0 : index
    %c1_17 = arith.constant 1 : index
    %c0_18 = arith.constant 0 : index
    %14 = vector.load %arg5[%c0_16, %c1_17, %c0_18] : memref<4x4x32xf32, #tpu.memory_space<vmem>>, vector<2x2x32xf32>
    %15 = vector.shape_cast %14 : vector<2x2x32xf32> to vector<4x32xf32>
    %16 = arith.truncf %15 : vector<4x32xf32> to vector<4x32xbf16>
    %c1_19 = arith.constant 1 : index
    %c0_20 = arith.constant 0 : index
    %c0_21 = arith.constant 0 : index
    %17 = vector.load %arg2[%c1_19, %c0_20, %c0_21] : memref<9x32x32xbf16, #tpu.memory_space<vmem>>, vector<1x32x32xbf16>
    %18 = vector.shape_cast %17 : vector<1x32x32xbf16> to vector<32x32xbf16>
    %cst_22 = arith.constant dense<0.000000e+00> : vector<4x32xf32>
    %19 = tpu.matmul %16, %18, %cst_22 {dimension_numbers = #tpu.dot_dimension_numbers<[1], [0], [0], [1], [0, 0, 1, 1], [], []>} : vector<4x32xbf16>, vector<32x32xbf16>, vector<4x32xf32> -> vector<4x32xf32>
    %20 = arith.addf %13, %19 : vector<4x32xf32>
    %c0_23 = arith.constant 0 : index
    %c2 = arith.constant 2 : index
    %c0_24 = arith.constant 0 : index
    %21 = vector.load %arg5[%c0_23, %c2, %c0_24] : memref<4x4x32xf32, #tpu.memory_space<vmem>>, vector<2x2x32xf32>
    %22 = vector.shape_cast %21 : vector<2x2x32xf32> to vector<4x32xf32>
    %23 = arith.truncf %22 : vector<4x32xf32> to vector<4x32xbf16>
    %c2_25 = arith.constant 2 : index
    %c0_26 = arith.constant 0 : index
    %c0_27 = arith.constant 0 : index
    %24 = vector.load %arg2[%c2_25, %c0_26, %c0_27] : memref<9x32x32xbf16, #tpu.memory_space<vmem>>, vector<1x32x32xbf16>
    %25 = vector.shape_cast %24 : vector<1x32x32xbf16> to vector<32x32xbf16>
    %cst_28 = arith.constant dense<0.000000e+00> : vector<4x32xf32>
    %26 = tpu.matmul %23, %25, %cst_28 {dimension_numbers = #tpu.dot_dimension_numbers<[1], [0], [0], [1], [0, 0, 1, 1], [], []>} : vector<4x32xbf16>, vector<32x32xbf16>, vector<4x32xf32> -> vector<4x32xf32>
    %27 = arith.addf %20, %26 : vector<4x32xf32>
    %c1_29 = arith.constant 1 : index
    %c0_30 = arith.constant 0 : index
    %c0_31 = arith.constant 0 : index
    %28 = vector.load %arg5[%c1_29, %c0_30, %c0_31] : memref<4x4x32xf32, #tpu.memory_space<vmem>>, vector<2x2x32xf32>
    %29 = vector.shape_cast %28 : vector<2x2x32xf32> to vector<4x32xf32>
    %30 = arith.truncf %29 : vector<4x32xf32> to vector<4x32xbf16>
    %c3 = arith.constant 3 : index
    %c0_32 = arith.constant 0 : index
    %c0_33 = arith.constant 0 : index
    %31 = vector.load %arg2[%c3, %c0_32, %c0_33] : memref<9x32x32xbf16, #tpu.memory_space<vmem>>, vector<1x32x32xbf16>
    %32 = vector.shape_cast %31 : vector<1x32x32xbf16> to vector<32x32xbf16>
    %cst_34 = arith.constant dense<0.000000e+00> : vector<4x32xf32>
    %33 = tpu.matmul %30, %32, %cst_34 {dimension_numbers = #tpu.dot_dimension_numbers<[1], [0], [0], [1], [0, 0, 1, 1], [], []>} : vector<4x32xbf16>, vector<32x32xbf16>, vector<4x32xf32> -> vector<4x32xf32>
    %34 = arith.addf %27, %33 : vector<4x32xf32>
    %c1_35 = arith.constant 1 : index
    %c1_36 = arith.constant 1 : index
    %c0_37 = arith.constant 0 : index
    %35 = vector.load %arg5[%c1_35, %c1_36, %c0_37] : memref<4x4x32xf32, #tpu.memory_space<vmem>>, vector<2x2x32xf32>
    %36 = vector.shape_cast %35 : vector<2x2x32xf32> to vector<4x32xf32>
    %37 = arith.truncf %36 : vector<4x32xf32> to vector<4x32xbf16>
    %c4 = arith.constant 4 : index
    %c0_38 = arith.constant 0 : index
    %c0_39 = arith.constant 0 : index
    %38 = vector.load %arg2[%c4, %c0_38, %c0_39] : memref<9x32x32xbf16, #tpu.memory_space<vmem>>, vector<1x32x32xbf16>
    %39 = vector.shape_cast %38 : vector<1x32x32xbf16> to vector<32x32xbf16>
    %cst_40 = arith.constant dense<0.000000e+00> : vector<4x32xf32>
    %40 = tpu.matmul %37, %39, %cst_40 {dimension_numbers = #tpu.dot_dimension_numbers<[1], [0], [0], [1], [0, 0, 1, 1], [], []>} : vector<4x32xbf16>, vector<32x32xbf16>, vector<4x32xf32> -> vector<4x32xf32>
    %41 = arith.addf %34, %40 : vector<4x32xf32>
    %c1_41 = arith.constant 1 : index
    %c2_42 = arith.constant 2 : index
    %c0_43 = arith.constant 0 : index
    %42 = vector.load %arg5[%c1_41, %c2_42, %c0_43] : memref<4x4x32xf32, #tpu.memory_space<vmem>>, vector<2x2x32xf32>
    %43 = vector.shape_cast %42 : vector<2x2x32xf32> to vector<4x32xf32>
    %44 = arith.truncf %43 : vector<4x32xf32> to vector<4x32xbf16>
    %c5 = arith.constant 5 : index
    %c0_44 = arith.constant 0 : index
    %c0_45 = arith.constant 0 : index
    %45 = vector.load %arg2[%c5, %c0_44, %c0_45] : memref<9x32x32xbf16, #tpu.memory_space<vmem>>, vector<1x32x32xbf16>
    %46 = vector.shape_cast %45 : vector<1x32x32xbf16> to vector<32x32xbf16>
    %cst_46 = arith.constant dense<0.000000e+00> : vector<4x32xf32>
    %47 = tpu.matmul %44, %46, %cst_46 {dimension_numbers = #tpu.dot_dimension_numbers<[1], [0], [0], [1], [0, 0, 1, 1], [], []>} : vector<4x32xbf16>, vector<32x32xbf16>, vector<4x32xf32> -> vector<4x32xf32>
    %48 = arith.addf %41, %47 : vector<4x32xf32>
    %c2_47 = arith.constant 2 : index
    %c0_48 = arith.constant 0 : index
    %c0_49 = arith.constant 0 : index
    %49 = vector.load %arg5[%c2_47, %c0_48, %c0_49] : memref<4x4x32xf32, #tpu.memory_space<vmem>>, vector<2x2x32xf32>
    %50 = vector.shape_cast %49 : vector<2x2x32xf32> to vector<4x32xf32>
    %51 = arith.truncf %50 : vector<4x32xf32> to vector<4x32xbf16>
    %c6 = arith.constant 6 : index
    %c0_50 = arith.constant 0 : index
    %c0_51 = arith.constant 0 : index
    %52 = vector.load %arg2[%c6, %c0_50, %c0_51] : memref<9x32x32xbf16, #tpu.memory_space<vmem>>, vector<1x32x32xbf16>
    %53 = vector.shape_cast %52 : vector<1x32x32xbf16> to vector<32x32xbf16>
    %cst_52 = arith.constant dense<0.000000e+00> : vector<4x32xf32>
    %54 = tpu.matmul %51, %53, %cst_52 {dimension_numbers = #tpu.dot_dimension_numbers<[1], [0], [0], [1], [0, 0, 1, 1], [], []>} : vector<4x32xbf16>, vector<32x32xbf16>, vector<4x32xf32> -> vector<4x32xf32>
    %55 = arith.addf %48, %54 : vector<4x32xf32>
    %c2_53 = arith.constant 2 : index
    %c1_54 = arith.constant 1 : index
    %c0_55 = arith.constant 0 : index
    %56 = vector.load %arg5[%c2_53, %c1_54, %c0_55] : memref<4x4x32xf32, #tpu.memory_space<vmem>>, vector<2x2x32xf32>
    %57 = vector.shape_cast %56 : vector<2x2x32xf32> to vector<4x32xf32>
    %58 = arith.truncf %57 : vector<4x32xf32> to vector<4x32xbf16>
    %c7 = arith.constant 7 : index
    %c0_56 = arith.constant 0 : index
    %c0_57 = arith.constant 0 : index
    %59 = vector.load %arg2[%c7, %c0_56, %c0_57] : memref<9x32x32xbf16, #tpu.memory_space<vmem>>, vector<1x32x32xbf16>
    %60 = vector.shape_cast %59 : vector<1x32x32xbf16> to vector<32x32xbf16>
    %cst_58 = arith.constant dense<0.000000e+00> : vector<4x32xf32>
    %61 = tpu.matmul %58, %60, %cst_58 {dimension_numbers = #tpu.dot_dimension_numbers<[1], [0], [0], [1], [0, 0, 1, 1], [], []>} : vector<4x32xbf16>, vector<32x32xbf16>, vector<4x32xf32> -> vector<4x32xf32>
    %62 = arith.addf %55, %61 : vector<4x32xf32>
    %c2_59 = arith.constant 2 : index
    %c2_60 = arith.constant 2 : index
    %c0_61 = arith.constant 0 : index
    %63 = vector.load %arg5[%c2_59, %c2_60, %c0_61] : memref<4x4x32xf32, #tpu.memory_space<vmem>>, vector<2x2x32xf32>
    %64 = vector.shape_cast %63 : vector<2x2x32xf32> to vector<4x32xf32>
    %65 = arith.truncf %64 : vector<4x32xf32> to vector<4x32xbf16>
    %c8 = arith.constant 8 : index
    %c0_62 = arith.constant 0 : index
    %c0_63 = arith.constant 0 : index
    %66 = vector.load %arg2[%c8, %c0_62, %c0_63] : memref<9x32x32xbf16, #tpu.memory_space<vmem>>, vector<1x32x32xbf16>
    %67 = vector.shape_cast %66 : vector<1x32x32xbf16> to vector<32x32xbf16>
    %cst_64 = arith.constant dense<0.000000e+00> : vector<4x32xf32>
    %68 = tpu.matmul %65, %67, %cst_64 {dimension_numbers = #tpu.dot_dimension_numbers<[1], [0], [0], [1], [0, 0, 1, 1], [], []>} : vector<4x32xbf16>, vector<32x32xbf16>, vector<4x32xf32> -> vector<4x32xf32>
    %69 = arith.addf %62, %68 : vector<4x32xf32>
    %c0_65 = arith.constant 0 : index
    %c0_66 = arith.constant 0 : index
    %70 = vector.load %arg3[%c0_65, %c0_66] : memref<1x32xf32, #tpu.memory_space<vmem>>, vector<1x32xf32>
    %71 = vector.broadcast %70 : vector<1x32xf32> to vector<4x32xf32>
    %72 = arith.addf %69, %71 : vector<4x32xf32>
    %cst_67 = arith.constant 0.000000e+00 : f32
    %73 = vector.broadcast %cst_67 : f32 to vector<4x32xf32>
    %74 = arith.maximumf %72, %73 : vector<4x32xf32>
    %75 = vector.shape_cast %74 : vector<4x32xf32> to vector<1x2x2x32xf32>
    %c0_68 = arith.constant 0 : index
    %c0_69 = arith.constant 0 : index
    %c0_70 = arith.constant 0 : index
    %c0_71 = arith.constant 0 : index
    %76 = vector.load %arg4[%c0_68, %c0_69, %c0_70, %c0_71] : memref<1x2x2x32xf32, #tpu.memory_space<vmem>>, vector<1x2x2x32xf32>
    tpu.vector_store %arg4[%c0_68, %c0_69, %c0_70, %c0_71], %75 {strides = array<i32>} : memref<1x2x2x32xf32, #tpu.memory_space<vmem>>, vector<1x2x2x32xf32>,
    return
  }
  func.func @transform_0(%arg0: i32) -> (i32, i32, i32, i32) {
    %c0_i32 = arith.constant 0 : i32
    %c0_i32_0 = arith.constant 0 : i32
    %c0_i32_1 = arith.constant 0 : i32
    %c0_i32_2 = arith.constant 0 : i32
    return %arg0, %c0_i32, %c0_i32_0, %c0_i32_1 : i32, i32, i32, i32
  }
  func.func @transform_1(%arg0: i32) -> (i32, i32, i32) {
    %c0_i32 = arith.constant 0 : i32
    %c0_i32_0 = arith.constant 0 : i32
    %c0_i32_1 = arith.constant 0 : i32
    %c0_i32_2 = arith.constant 0 : i32
    return %c0_i32, %c0_i32_0, %c0_i32_1 : i32, i32, i32
  }
  func.func @transform_2(%arg0: i32) -> (i32, i32) {
    %c0_i32 = arith.constant 0 : i32
    %c0_i32_0 = arith.constant 0 : i32
    %c0_i32_1 = arith.constant 0 : i32
    return %c0_i32, %c0_i32_0 : i32, i32
  }
  func.func @transform_3(%arg0: i32) -> (i32, i32, i32, i32) {
    %c0_i32 = arith.constant 0 : i32
    %c0_i32_0 = arith.constant 0 : i32
    %c0_i32_1 = arith.constant 0 : i32
    %c0_i32_2 = arith.constant 0 : i32
    return %arg0, %c0_i32, %c0_i32_0, %c0_i32_1 : i32, i32, i32, i32
  }
}

</mosaic_0001>

<llo_original>
// kernel: tpu_custom_call.1
$region0: #{tpu_custom_call.1}
  #allocation0 [shape = 'u32[]', space=smem, size = 0x4, offset = 0x4, fixed_abs, tag = 'smem constant byte address 0x4 - core index']
  #allocation1 [shape = 'u32[144,128]{1,0:T(1,128)}', space=vmem, size = 0x12000, scoped, tag = 'internal scratch']
  #allocation2 [shape = 'f32[4,4,32]{2,1,0:T(4,128)}', space=vmem, size = 0x2000, scoped, tag = 'scratch operand']
  %s0 = inlined_call_operand.hbm [shape: bf16[2,2,2,32], index: 0, kind: input, shape index: {}]
  %s1 = inlined_call_operand.hbm [shape: bf16[9,32,32], index: 1, kind: input, shape index: {}]
  %s2 = inlined_call_operand.vmem [shape: f32[1,32], index: 2, kind: input, shape index: {}]
  %s3 = inlined_call_operand.hbm [shape: f32[2,2,2,32], index: 3, kind: output, shape index: {}]
  %s4 = sld [smem:[#allocation0]]
  $region53: #{tpu_custom_call.1} parent=0
    _
  %s6 = ssub.s32 1, %s4
  %s7 = scalar_select 0, %s6, %s4
  $region1: #{tpu_custom_call.1} parent=0
    #allocation3 [shape = 'u8[2048]{0}', space=vmem, size = 0x800, scoped, tag = 'input window, operand 0']
    #allocation4 [shape = 's32[2]{0}', space=sflag, size = 0x8, scoped, tag = 'scoped memory for tpu_custom_call.1']
    #allocation5 [shape = 's32[2]{0}', space=sflag, size = 0x8, scoped, tag = 'scoped memory for tpu_custom_call.1']
    #allocation6 [shape = 'u8[73728]{0}', space=vmem, size = 0x12000, scoped, tag = 'input window, operand 1, single buffered']
    #allocation7 [shape = 's32[1]{0}', space=sflag, size = 0x4, scoped, tag = 'scoped memory for tpu_custom_call.1']
    #allocation8 [shape = 'u8[4096]{0}', space=vmem, size = 0x1000, scoped, tag = 'output window, operand 0']
    %8 = vsyncpa [#allocation4], 0
    %s9 = scalar_lea.sflag [#allocation4], 1
    %10 = vsyncpa %s9, 0
    %11 = vsyncpa [#allocation7], 0
    %12 = vsyncpa [#allocation5], 0
    %s13 = scalar_lea.sflag [#allocation5], 1
    %14 = vsyncpa %s13, 0
    loop: start=0, step=1, limit=4
    $region2: #{tpu_custom_call.1} parent=1 // loop_pre_header
      _
    $region3: #{tpu_custom_call.1} parent=1 // loop_header
      %s16 = sphi 0, %s20
      %p17 = scmp.ge.s32.totalorder %s16, 4
      %s26 = sphi 0, %s28
      %s29 = sphi 0, %s26
      %s30 = sphi 0, %s29
      %s46 = sphi 0, %s30
      %s50 = sphi 0, %s50
      %s52 = sphi 0, %s50
      %s53 = sphi 0, %s52
      %s67 = sphi 0, %s53
      %s71 = sphi 0, %s71
      %s73 = sphi 0, %s71
      %s74 = sphi 0, %s73
      %s88 = sphi 0, %s74
      %s94 = sphi 0, %s96
      %s97 = sphi 0, %s94
      %s98 = sphi 0, %s97
      %s114 = sphi 0, %s98
    $region4: #{tpu_custom_call.1} parent=1 // loop_header_branch
      %19 = sbr.rel (%p17) target = $region8
    $region5: #{tpu_custom_call.1} parent=1 // loop_body
      %s21 = ssub.s32 %s16, 1
      %s22 = ssub.s32 %s16, 2
      %s23 = sadd.s32 %s16, 1
      %s24 = ssub.s32 %s16, %s23
      %p25 = scmp.eq.s32.totalorder %s24, 0
      %s27 = sadd.s32 %s26, 1
      %s28 = scalar_select %p25, %s26, %s27
      %p31 = pneg %p25
      %p32 = scmp.eq.s32.totalorder %s16, 1
      %p33 = por %p31, %p32
      %p34 = scmp.ne.s32.totalorder %s26, %s29
      %p35 = scmp.eq.s32.totalorder %s16, 0
      %p36 = por %p34, %p35
      %p37 = scmp.ne.s32.totalorder %s26, %s29
      %p38 = scmp.eq.s32.totalorder %s21, 1
      %p39 = por %p37, %p38
      %p40 = scmp.ne.s32.totalorder %s29, %s30
      %p41 = scmp.eq.s32.totalorder %s21, 0
      %p42 = por %p40, %p41
      %p43 = scmp.ne.s32.totalorder %s29, %s30
      %p44 = scmp.eq.s32.totalorder %s22, 1
      %p45 = por %p43, %p44
      %p47 = scmp.ne.s32.totalorder %s30, %s46
      %p48 = scmp.eq.s32.totalorder %s22, 0
      %p49 = por %p47, %p48
      %s51 = sadd.s32 %s50, 1
      %p54 = scmp.eq.s32.totalorder %s16, 1
      %p55 = scmp.ne.s32.totalorder %s50, %s52
      %p56 = scmp.eq.s32.totalorder %s16, 0
      %p57 = por %p55, %p56
      %p58 = scmp.ne.s32.totalorder %s50, %s52
      %p59 = scmp.eq.s32.totalorder %s21, 1
      %p60 = por %p58, %p59
      %p61 = scmp.ne.s32.totalorder %s52, %s53
      %p62 = scmp.eq.s32.totalorder %s21, 0
      %p63 = por %p61, %p62
      %p64 = scmp.ne.s32.totalorder %s52, %s53
      %p65 = scmp.eq.s32.totalorder %s22, 1
      %p66 = por %p64, %p65
      %p68 = scmp.ne.s32.totalorder %s53, %s67
      %p69 = scmp.eq.s32.totalorder %s22, 0
      %p70 = por %p68, %p69
      %s72 = sadd.s32 %s71, 1
      %p75 = scmp.eq.s32.totalorder %s16, 1
      %p76 = scmp.ne.s32.totalorder %s71, %s73
      %p77 = scmp.eq.s32.totalorder %s16, 0
      %p78 = por %p76, %p77
      %p79 = scmp.ne.s32.totalorder %s71, %s73
      %p80 = scmp.eq.s32.totalorder %s21, 1
      %p81 = por %p79, %p80
      %p82 = scmp.ne.s32.totalorder %s73, %s74
      %p83 = scmp.eq.s32.totalorder %s21, 0
      %p84 = por %p82, %p83
      %p85 = scmp.ne.s32.totalorder %s73, %s74
      %p86 = scmp.eq.s32.totalorder %s22, 1
      %p87 = por %p85, %p86
      %p89 = scmp.ne.s32.totalorder %s74, %s88
      %p90 = scmp.eq.s32.totalorder %s22, 0
      %p91 = por %p89, %p90
      %s92 = ssub.s32 %s16, %s23
      %p93 = scmp.eq.s32.totalorder %s92, 0
      %s95 = sadd.s32 %s94, 1
      %s96 = scalar_select %p93, %s94, %s95
      %p99 = pneg %p93
      %p100 = scmp.eq.s32.totalorder %s16, 1
      %p101 = por %p99, %p100
      %p102 = scmp.ne.s32.totalorder %s94, %s97
      %p103 = scmp.eq.s32.totalorder %s16, 0
      %p104 = por %p102, %p103
      %p105 = scmp.ne.s32.totalorder %s94, %s97
      %p106 = scmp.eq.s32.totalorder %s21, 1
      %p107 = por %p105, %p106
      %p108 = scmp.ne.s32.totalorder %s97, %s98
      %p109 = scmp.eq.s32.totalorder %s21, 0
      %p110 = por %p108, %p109
      %p111 = scmp.ne.s32.totalorder %s97, %s98
      %p112 = scmp.eq.s32.totalorder %s22, 1
      %p113 = por %p111, %p112
      %p115 = scmp.ne.s32.totalorder %s98, %s114
      %p116 = scmp.eq.s32.totalorder %s22, 0
      %p117 = por %p115, %p116
      %p118 = scmp.le.s32.totalorder 1, %s16
      %p119 = scmp.lt.s32.totalorder %s16, 3
      %p120 = pnand %p118, %p119
      %p121 = pneg %p120
      // Predicated region
      $region9: #{tpu_custom_call.1} parent=5 // pred_check
        _
      $region10: #{tpu_custom_call.1} parent=5 // pred_check_branch
        %123 = sbr.rel (%p120) target = $region12
      $region11: #{tpu_custom_call.1} parent=5 // pred_region
        %s124 = ssub.s32 %s16, 1
        // Predicated region
        $region13: #{tpu_custom_call.1} parent=11 // pred_check
          %p125 = pneg %p63
        $region14: #{tpu_custom_call.1} parent=11 // pred_check_branch
          %127 = sbr.rel (%p125) target = $region16
        $region15: #{tpu_custom_call.1} parent=11 // pred_region
          %s129 = ssub.s32 2304, 2304
          %130 = vsyncadd [#allocation7], %s129
          %s131 = sshll.u32 [#allocation6], 4
          %s132 = int_to_ptr.vmem [resolvable:$true] %s131
          %137 = dma.hbm_to_vmem [thread:$0]  %s1, 2304, %s132, [#allocation7], 64, 64, 4
        $region16: #{tpu_custom_call.1} parent=11 // pred_fallthru
          _
        // Predicated region
        $region17: #{tpu_custom_call.1} parent=11 // pred_check
          %p138 = pneg %p84
        $region18: #{tpu_custom_call.1} parent=11 // pred_check_branch
          %140 = sbr.rel (%p138) target = $region20
        $region19: #{tpu_custom_call.1} parent=11 // pred_region
          _
        $region20: #{tpu_custom_call.1} parent=11 // pred_fallthru
          _
      $region12: #{tpu_custom_call.1} parent=5 // pred_fallthru
        _
      %p141 = scmp.lt.s32.totalorder %s16, 2
      // Predicated region
      $region21: #{tpu_custom_call.1} parent=5 // pred_check
        %p142 = pneg %p141
      $region22: #{tpu_custom_call.1} parent=5 // pred_check_branch
        %144 = sbr.rel (%p142) target = $region24
      $region23: #{tpu_custom_call.1} parent=5 // pred_region
        // Predicated region
        $region25: #{tpu_custom_call.1} parent=23 // pred_check
          %p145 = pneg %p36
        $region26: #{tpu_custom_call.1} parent=23 // pred_check_branch
          %147 = sbr.rel (%p145) target = $region28
        $region27: #{tpu_custom_call.1} parent=23 // pred_region
          %s148 = sand.u32 %s26, 1
          %s149 = scalar_lea.sflag [#allocation4], %s148
          %s150 = sand.u32 %s26, 1
          %s151 = smul.addr %s150, 2
          %s152 = scalar_lea.vmem [#allocation3], %s151
          %s154 = ssub.s32 32, 32
          %155 = vsyncadd %s149, %s154
          %s156 = smul.addr %s16, 2
          %s157 = smul.addr %s156, 16
          %s158 = scalar_lea.hbm %s0, %s157
          %s159 = sshll.u32 %s152, 4
          %s160 = int_to_ptr.vmem [resolvable:$true] %s159
          %165 = dma.hbm_to_vmem [thread:$0]  %s158, 32, %s160, %s149, 16, 16, 1
        $region28: #{tpu_custom_call.1} parent=23 // pred_fallthru
          _
      $region24: #{tpu_custom_call.1} parent=5 // pred_fallthru
        _
      %p166 = scmp.le.s32.totalorder 1, %s16
      %p167 = scmp.lt.s32.totalorder %s16, 3
      %p168 = pnand %p166, %p167
      %p169 = pneg %p168
      // Predicated region
      $region29: #{tpu_custom_call.1} parent=5 // pred_check
        _
      $region30: #{tpu_custom_call.1} parent=5 // pred_check_branch
        %171 = sbr.rel (%p168) target = $region32
      $region31: #{tpu_custom_call.1} parent=5 // pred_region
        %s172 = ssub.s32 %s16, 1
        %s173 = sand.u32 %s29, 1
        %s174 = scalar_lea.sflag [#allocation4], %s173
        %s175 = sand.u32 %s29, 1
        %s176 = smul.addr %s175, 2
        %s177 = scalar_lea.vmem [#allocation3], %s176
        // Predicated region
        $region33: #{tpu_custom_call.1} parent=31 // pred_check
          %p178 = pneg %p42
        $region34: #{tpu_custom_call.1} parent=31 // pred_check_branch
          %180 = sbr.rel (%p178) target = $region36
        $region35: #{tpu_custom_call.1} parent=31 // pred_region
          %181 = dma.done %s174, 32
        $region36: #{tpu_custom_call.1} parent=31 // pred_fallthru
          _
        // Predicated region
        $region37: #{tpu_custom_call.1} parent=31 // pred_check
          %p182 = pneg %p63
        $region38: #{tpu_custom_call.1} parent=31 // pred_check_branch
          %184 = sbr.rel (%p182) target = $region40
        $region39: #{tpu_custom_call.1} parent=31 // pred_region
          %185 = dma.done [#allocation7], 2304
        $region40: #{tpu_custom_call.1} parent=31 // pred_fallthru
          _
        %s186 = sand.u32 %s29, 1
        %s187 = scalar_lea.sflag [#allocation4], %s186
        %s188 = sand.u32 %s29, 1
        %s189 = smul.addr %s188, 2
        %s190 = scalar_lea.vmem [#allocation3], %s189
        %p191 = pneg %p42
        %p192 = pneg %p39
        %p193 = pneg %p63
        %p194 = pneg %p60
        %p195 = pneg %p84
        %p196 = pneg %p81
        %p197 = pneg %p110
        %p198 = pneg %p107
        %s199 = sand.u32 %s97, 1
        %s200 = scalar_lea.sflag [#allocation5], %s199
        %s201 = sand.u32 %s97, 1
        %s202 = smul.addr %s201, 4
        %s203 = scalar_lea.vmem [#allocation8], %s202
        %vm205 = vcmask 257024
        %206 = vst.msk [vmem:[#allocation2] sm:$0xf] %vm205, 0.0
        %207 = vst.msk [vmem:[#allocation2 + $0x4] sm:$0xf] %vm205, 0.0
        %208 = vst.msk [vmem:[#allocation2 + $0x8] sm:$0xf] %vm205, 0.0
        %209 = vst.msk [vmem:[#allocation2 + $0xc] sm:$0xf] %vm205, 0.0
        %v210 = vld [vmem:[%s177] sm:$0x1]
        %v211 = vld [vmem:[%s177 + $0x1] sm:$0x1]
        %v212 = vunpack.c.l.bf16 %v210
        %v213 = vunpack.c.l.bf16 %v211
        %s214 = scalar_lea.vmem [#allocation2], 4
        %vm215 = vcmask 254976
        %216 = vst.msk [vmem:[%s214 + $0x1] sm:$0x3] %vm215, %v212
        %217 = vst.msk [vmem:[%s214 + $0x5] sm:$0x3] %vm215, %v213
        %v218 = vld [vmem:[#allocation2] sm:$0x3]
        %v219 = vld [vmem:[#allocation2 + $0x4] sm:$0x3]
        %v222 = vcombine.low %v218, %v219
        %v224 = vunpack.c.l.s4 1983009808
        %v225 = vunpack.c.0.s8 %v224
        %v226 = vlaneseq
        %v227 = vshrl.u32 %v226, 7
        %v228 = vsub.s32 %v225, %v227
        %v229 = vrot.slane %v222, %v228
        %v231 = vpack.c.bf16 %v229, %v229
        %v232 = vld [vmem:[#allocation6] sm:$0xf]
        %v233 = vld [vmem:[#allocation6 + $0x4] sm:$0xf]
        %v234 = vld [vmem:[#allocation6 + $0x8] sm:$0xf]
        %v235 = vld [vmem:[#allocation6 + $0xc] sm:$0xf]
        %v236 = vld [vmem:[#allocation2 + $0x1] sm:$0x3]
        %v237 = vld [vmem:[#allocation2 + $0x5] sm:$0x3]
        %v240 = vcombine.low %v236, %v237
        %v242 = vunpack.c.l.s4 1983009808
        %v243 = vunpack.c.0.s8 %v242
        %v244 = vlaneseq
        %v245 = vshrl.u32 %v244, 7
        %v246 = vsub.s32 %v243, %v245
        %v247 = vrot.slane %v240, %v246
        %v249 = vpack.c.bf16 %v247, %v247
        %s250 = scalar_lea.vmem [#allocation6], 16
        %v251 = vld [vmem:[%s250] sm:$0xf]
        %v252 = vld [vmem:[%s250 + $0x4] sm:$0xf]
        %v253 = vld [vmem:[%s250 + $0x8] sm:$0xf]
        %v254 = vld [vmem:[%s250 + $0xc] sm:$0xf]
        %v259 = vunpack.c.l.b16 %v251
        %v260 = vunpack.c.l.b16 %v252
        %v261 = vunpack.c.l.b16 %v253
        %v262 = vunpack.c.l.b16 %v254
        %v263 = vpack.c.b16 %v260, %v259
        %v264 = vpack.c.b16 %v262, %v261
        %vm267 = vcmask 261120
        %v269 = vsel %vm267, %v249, 0
        %271 = vmatprep.subr.bf16.mxu0 0
        %272 = vmatpush1.bf16.msra.mxu0 %v263
        %273 = vmatprep.subr.bf16.mxu0 0
        %274 = vmatpush1.bf16.msra.mxu0 %v264
        %275 = vmatprep.subr.bf16.mxu0 0
        %276 = vmatpush1.bf16.msra.mxu0 0
        %277 = vmatprep.subr.bf16.mxu0 0
        %278 = vmatpush1.bf16.msra.mxu0 0
        %279 = vmatprep.subr.bf16.mxu0 0
        %280 = vmatpush1.bf16.msra.mxu0 0
        %281 = vmatprep.subr.bf16.mxu0 0
        %282 = vmatpush1.bf16.msra.mxu0 0
        %283 = vmatprep.subr.bf16.mxu0 0
        %284 = vmatpush1.bf16.msra.mxu0 0
        %285 = vmatprep.subr.bf16.mxu0 0
        %286 = vmatpush1.bf16.msra.mxu0 0
        %287 = vmatprep.subr.bf16.mxu0 0
        %288 = vmatpush1.bf16.msra.mxu0 0
        %289 = vmatprep.subr.bf16.mxu0 0
        %290 = vmatpush1.bf16.msra.mxu0 0
        %291 = vmatprep.subr.bf16.mxu0 0
        %292 = vmatpush1.bf16.msra.mxu0 0
        %293 = vmatprep.subr.bf16.mxu0 0
        %294 = vmatpush1.bf16.msra.mxu0 0
        %295 = vmatprep.subr.bf16.mxu0 0
        %296 = vmatpush1.bf16.msra.mxu0 0
        %297 = vmatprep.subr.bf16.mxu0 0
        %298 = vmatpush1.bf16.msra.mxu0 0
        %299 = vmatprep.subr.bf16.mxu0 0
        %300 = vmatpush1.bf16.msra.mxu0 0
        %301 = vmatprep.subr.bf16.mxu0 0
        %302 = vmatpush1.bf16.msra.mxu0 0
        %303 = vmatprep.mubr.bf16.mxu0 0
        %304 = vmatmul.mubr.bf16.gmra.mrb[0].mxu0 %v269
        %v305 = vpop.f32.mrb[0].mxu0
        %v306 = vadd.f32 0.0, %v305
        %v307 = vpop.f32.mrb[0].mxu0
        %v308 = vpop.f32.mrb[0].mxu0
        %v309 = vpop.f32.mrb[0].mxu0
        %310 = vdwg.mxu0
        %v315 = vunpack.c.l.b16 %v232
        %v316 = vunpack.c.l.b16 %v233
        %v317 = vunpack.c.l.b16 %v234
        %v318 = vunpack.c.l.b16 %v235
        %v319 = vpack.c.b16 %v316, %v315
        %v320 = vpack.c.b16 %v318, %v317
        %v324 = vsel %vm267, %v231, 0
        %326 = vmatprep.subr.bf16.mxu0 0
        %327 = vmatpush1.bf16.msra.mxu0 %v319
        %328 = vmatprep.subr.bf16.mxu0 0
        %329 = vmatpush1.bf16.msra.mxu0 %v320
        %330 = vmatprep.subr.bf16.mxu0 0
        %331 = vmatpush1.bf16.msra.mxu0 0
        %332 = vmatprep.subr.bf16.mxu0 0
        %333 = vmatpush1.bf16.msra.mxu0 0
        %334 = vmatprep.subr.bf16.mxu0 0
        %335 = vmatpush1.bf16.msra.mxu0 0
        %336 = vmatprep.subr.bf16.mxu0 0
        %337 = vmatpush1.bf16.msra.mxu0 0
        %338 = vmatprep.subr.bf16.mxu0 0
        %339 = vmatpush1.bf16.msra.mxu0 0
        %340 = vmatprep.subr.bf16.mxu0 0
        %341 = vmatpush1.bf16.msra.mxu0 0
        %342 = vmatprep.subr.bf16.mxu0 0
        %343 = vmatpush1.bf16.msra.mxu0 0
        %344 = vmatprep.subr.bf16.mxu0 0
        %345 = vmatpush1.bf16.msra.mxu0 0
        %346 = vmatprep.subr.bf16.mxu0 0
        %347 = vmatpush1.bf16.msra.mxu0 0
        %348 = vmatprep.subr.bf16.mxu0 0
        %349 = vmatpush1.bf16.msra.mxu0 0
        %350 = vmatprep.subr.bf16.mxu0 0
        %351 = vmatpush1.bf16.msra.mxu0 0
        %352 = vmatprep.subr.bf16.mxu0 0
        %353 = vmatpush1.bf16.msra.mxu0 0
        %354 = vmatprep.subr.bf16.mxu0 0
        %355 = vmatpush1.bf16.msra.mxu0 0
        %356 = vmatprep.subr.bf16.mxu0 0
        %357 = vmatpush1.bf16.msra.mxu0 0
        %358 = vmatprep.mubr.bf16.mxu0 0
        %359 = vmatmul.mubr.bf16.gmra.mrb[0].mxu0 %v324
        %v360 = vpop.f32.mrb[0].mxu0
        %v361 = vadd.f32 %v306, %v360
        %v362 = vpop.f32.mrb[0].mxu0
        %v363 = vpop.f32.mrb[0].mxu0
        %v364 = vpop.f32.mrb[0].mxu0
        %365 = vdwg.mxu0
        %v366 = vld [vmem:[#allocation2 + $0x2] sm:$0x3]
        %v367 = vld [vmem:[#allocation2 + $0x6] sm:$0x3]
        %v370 = vcombine.low %v366, %v367
        %v372 = vunpack.c.l.s4 1983009808
        %v373 = vunpack.c.0.s8 %v372
        %v374 = vlaneseq
        %v375 = vshrl.u32 %v374, 7
        %v376 = vsub.s32 %v373, %v375
        %v377 = vrot.slane %v370, %v376
        %v379 = vpack.c.bf16 %v377, %v377
        %s380 = scalar_lea.vmem [#allocation6], 32
        %v381 = vld [vmem:[%s380] sm:$0xf]
        %v382 = vld [vmem:[%s380 + $0x4] sm:$0xf]
        %v383 = vld [vmem:[%s380 + $0x8] sm:$0xf]
        %v384 = vld [vmem:[%s380 + $0xc] sm:$0xf]
        %v389 = vunpack.c.l.b16 %v381
        %v390 = vunpack.c.l.b16 %v382
        %v391 = vunpack.c.l.b16 %v383
        %v392 = vunpack.c.l.b16 %v384
        %v393 = vpack.c.b16 %v390, %v389
        %v394 = vpack.c.b16 %v392, %v391
        %v398 = vsel %vm267, %v379, 0
        %400 = vmatprep.subr.bf16.mxu0 0
        %401 = vmatpush1.bf16.msra.mxu0 %v393
        %402 = vmatprep.subr.bf16.mxu0 0
        %403 = vmatpush1.bf16.msra.mxu0 %v394
        %404 = vmatprep.subr.bf16.mxu0 0
        %405 = vmatpush1.bf16.msra.mxu0 0
        %406 = vmatprep.subr.bf16.mxu0 0
        %407 = vmatpush1.bf16.msra.mxu0 0
        %408 = vmatprep.subr.bf16.mxu0 0
        %409 = vmatpush1.bf16.msra.mxu0 0
        %410 = vmatprep.subr.bf16.mxu0 0
        %411 = vmatpush1.bf16.msra.mxu0 0
        %412 = vmatprep.subr.bf16.mxu0 0
        %413 = vmatpush1.bf16.msra.mxu0 0
        %414 = vmatprep.subr.bf16.mxu0 0
        %415 = vmatpush1.bf16.msra.mxu0 0
        %416 = vmatprep.subr.bf16.mxu0 0
        %417 = vmatpush1.bf16.msra.mxu0 0
        %418 = vmatprep.subr.bf16.mxu0 0
        %419 = vmatpush1.bf16.msra.mxu0 0
        %420 = vmatprep.subr.bf16.mxu0 0
        %421 = vmatpush1.bf16.msra.mxu0 0
        %422 = vmatprep.subr.bf16.mxu0 0
        %423 = vmatpush1.bf16.msra.mxu0 0
        %424 = vmatprep.subr.bf16.mxu0 0
        %425 = vmatpush1.bf16.msra.mxu0 0
        %426 = vmatprep.subr.bf16.mxu0 0
        %427 = vmatpush1.bf16.msra.mxu0 0
        %428 = vmatprep.subr.bf16.mxu0 0
        %429 = vmatpush1.bf16.msra.mxu0 0
        %430 = vmatprep.subr.bf16.mxu0 0
        %431 = vmatpush1.bf16.msra.mxu0 0
        %432 = vmatprep.mubr.bf16.mxu0 0
        %433 = vmatmul.mubr.bf16.gmra.mrb[0].mxu0 %v398
        %v434 = vpop.f32.mrb[0].mxu0
        %v435 = vadd.f32 0.0, %v434
        %v436 = vpop.f32.mrb[0].mxu0
        %v437 = vpop.f32.mrb[0].mxu0
        %v438 = vpop.f32.mrb[0].mxu0
        %439 = vdwg.mxu0
        %v440 = vadd.f32 %v361, %v435
        %v441 = vld [vmem:[%s214] sm:$0x3]
        %v442 = vld [vmem:[%s214 + $0x4] sm:$0x3]
        %v445 = vcombine.low %v441, %v442
        %v447 = vunpack.c.l.s4 1983009808
        %v448 = vunpack.c.0.s8 %v447
        %v449 = vlaneseq
        %v450 = vshrl.u32 %v449, 7
        %v451 = vsub.s32 %v448, %v450
        %v452 = vrot.slane %v445, %v451
        %v454 = vpack.c.bf16 %v452, %v452
        %s455 = scalar_lea.vmem [#allocation6], 48
        %v456 = vld [vmem:[%s455] sm:$0xf]
        %v457 = vld [vmem:[%s455 + $0x4] sm:$0xf]
        %v458 = vld [vmem:[%s455 + $0x8] sm:$0xf]
        %v459 = vld [vmem:[%s455 + $0xc] sm:$0xf]
        %v464 = vunpack.c.l.b16 %v456
        %v465 = vunpack.c.l.b16 %v457
        %v466 = vunpack.c.l.b16 %v458
        %v467 = vunpack.c.l.b16 %v459
        %v468 = vpack.c.b16 %v465, %v464
        %v469 = vpack.c.b16 %v467, %v466
        %v473 = vsel %vm267, %v454, 0
        %475 = vmatprep.subr.bf16.mxu0 0
        %476 = vmatpush1.bf16.msra.mxu0 %v468
        %477 = vmatprep.subr.bf16.mxu0 0
        %478 = vmatpush1.bf16.msra.mxu0 %v469
        %479 = vmatprep.subr.bf16.mxu0 0
        %480 = vmatpush1.bf16.msra.mxu0 0
        %481 = vmatprep.subr.bf16.mxu0 0
        %482 = vmatpush1.bf16.msra.mxu0 0
        %483 = vmatprep.subr.bf16.mxu0 0
        %484 = vmatpush1.bf16.msra.mxu0 0
        %485 = vmatprep.subr.bf16.mxu0 0
        %486 = vmatpush1.bf16.msra.mxu0 0
        %487 = vmatprep.subr.bf16.mxu0 0
        %488 = vmatpush1.bf16.msra.mxu0 0
        %489 = vmatprep.subr.bf16.mxu0 0
        %490 = vmatpush1.bf16.msra.mxu0 0
        %491 = vmatprep.subr.bf16.mxu0 0
        %492 = vmatpush1.bf16.msra.mxu0 0
        %493 = vmatprep.subr.bf16.mxu0 0
        %494 = vmatpush1.bf16.msra.mxu0 0
        %495 = vmatprep.subr.bf16.mxu0 0
        %496 = vmatpush1.bf16.msra.mxu0 0
        %497 = vmatprep.subr.bf16.mxu0 0
        %498 = vmatpush1.bf16.msra.mxu0 0
        %499 = vmatprep.subr.bf16.mxu0 0
        %500 = vmatpush1.bf16.msra.mxu0 0
        %501 = vmatprep.subr.bf16.mxu0 0
        %502 = vmatpush1.bf16.msra.mxu0 0
        %503 = vmatprep.subr.bf16.mxu0 0
        %504 = vmatpush1.bf16.msra.mxu0 0
        %505 = vmatprep.subr.bf16.mxu0 0
        %506 = vmatpush1.bf16.msra.mxu0 0
        %507 = vmatprep.mubr.bf16.mxu0 0
        %508 = vmatmul.mubr.bf16.gmra.mrb[0].mxu0 %v473
        %v509 = vpop.f32.mrb[0].mxu0
        %v510 = vadd.f32 0.0, %v509
        %v511 = vpop.f32.mrb[0].mxu0
        %v512 = vpop.f32.mrb[0].mxu0
        %v513 = vpop.f32.mrb[0].mxu0
        %514 = vdwg.mxu0
        %v515 = vadd.f32 %v440, %v510
        %v516 = vld [vmem:[%s214 + $0x1] sm:$0x3]
        %v517 = vld [vmem:[%s214 + $0x5] sm:$0x3]
        %v520 = vcombine.low %v516, %v517
        %v522 = vunpack.c.l.s4 1983009808
        %v523 = vunpack.c.0.s8 %v522
        %v524 = vlaneseq
        %v525 = vshrl.u32 %v524, 7
        %v526 = vsub.s32 %v523, %v525
        %v527 = vrot.slane %v520, %v526
        %v529 = vpack.c.bf16 %v527, %v527
        %s530 = scalar_lea.vmem [#allocation6], 64
        %v531 = vld [vmem:[%s530] sm:$0xf]
        %v532 = vld [vmem:[%s530 + $0x4] sm:$0xf]
        %v533 = vld [vmem:[%s530 + $0x8] sm:$0xf]
        %v534 = vld [vmem:[%s530 + $0xc] sm:$0xf]
        %v539 = vunpack.c.l.b16 %v531
        %v540 = vunpack.c.l.b16 %v532
        %v541 = vunpack.c.l.b16 %v533
        %v542 = vunpack.c.l.b16 %v534
        %v543 = vpack.c.b16 %v540, %v539
        %v544 = vpack.c.b16 %v542, %v541
        %v548 = vsel %vm267, %v529, 0
        %550 = vmatprep.subr.bf16.mxu0 0
        %551 = vmatpush1.bf16.msra.mxu0 %v543
        %552 = vmatprep.subr.bf16.mxu0 0
        %553 = vmatpush1.bf16.msra.mxu0 %v544
        %554 = vmatprep.subr.bf16.mxu0 0
        %555 = vmatpush1.bf16.msra.mxu0 0
        %556 = vmatprep.subr.bf16.mxu0 0
        %557 = vmatpush1.bf16.msra.mxu0 0
        %558 = vmatprep.subr.bf16.mxu0 0
        %559 = vmatpush1.bf16.msra.mxu0 0
        %560 = vmatprep.subr.bf16.mxu0 0
        %561 = vmatpush1.bf16.msra.mxu0 0
        %562 = vmatprep.subr.bf16.mxu0 0
        %563 = vmatpush1.bf16.msra.mxu0 0
        %564 = vmatprep.subr.bf16.mxu0 0
        %565 = vmatpush1.bf16.msra.mxu0 0
        %566 = vmatprep.subr.bf16.mxu0 0
        %567 = vmatpush1.bf16.msra.mxu0 0
        %568 = vmatprep.subr.bf16.mxu0 0
        %569 = vmatpush1.bf16.msra.mxu0 0
        %570 = vmatprep.subr.bf16.mxu0 0
        %571 = vmatpush1.bf16.msra.mxu0 0
        %572 = vmatprep.subr.bf16.mxu0 0
        %573 = vmatpush1.bf16.msra.mxu0 0
        %574 = vmatprep.subr.bf16.mxu0 0
        %575 = vmatpush1.bf16.msra.mxu0 0
        %576 = vmatprep.subr.bf16.mxu0 0
        %577 = vmatpush1.bf16.msra.mxu0 0
        %578 = vmatprep.subr.bf16.mxu0 0
        %579 = vmatpush1.bf16.msra.mxu0 0
        %580 = vmatprep.subr.bf16.mxu0 0
        %581 = vmatpush1.bf16.msra.mxu0 0
        %582 = vmatprep.mubr.bf16.mxu0 0
        %583 = vmatmul.mubr.bf16.gmra.mrb[0].mxu0 %v548
        %v584 = vpop.f32.mrb[0].mxu0
        %v585 = vadd.f32 0.0, %v584
        %v586 = vpop.f32.mrb[0].mxu0
        %v587 = vpop.f32.mrb[0].mxu0
        %v588 = vpop.f32.mrb[0].mxu0
        %589 = vdwg.mxu0
        %v590 = vadd.f32 %v515, %v585
        %v591 = vld [vmem:[%s214 + $0x2] sm:$0x3]
        %v592 = vld [vmem:[%s214 + $0x6] sm:$0x3]
        %v595 = vcombine.low %v591, %v592
        %v597 = vunpack.c.l.s4 1983009808
        %v598 = vunpack.c.0.s8 %v597
        %v599 = vlaneseq
        %v600 = vshrl.u32 %v599, 7
        %v601 = vsub.s32 %v598, %v600
        %v602 = vrot.slane %v595, %v601
        %v604 = vpack.c.bf16 %v602, %v602
        %s605 = scalar_lea.vmem [#allocation6], 80
        %v606 = vld [vmem:[%s605] sm:$0xf]
        %v607 = vld [vmem:[%s605 + $0x4] sm:$0xf]
        %v608 = vld [vmem:[%s605 + $0x8] sm:$0xf]
        %v609 = vld [vmem:[%s605 + $0xc] sm:$0xf]
        %v614 = vunpack.c.l.b16 %v606
        %v615 = vunpack.c.l.b16 %v607
        %v616 = vunpack.c.l.b16 %v608
        %v617 = vunpack.c.l.b16 %v609
        %v618 = vpack.c.b16 %v615, %v614
        %v619 = vpack.c.b16 %v617, %v616
        %v623 = vsel %vm267, %v604, 0
        %625 = vmatprep.subr.bf16.mxu0 0
        %626 = vmatpush1.bf16.msra.mxu0 %v618
        %627 = vmatprep.subr.bf16.mxu0 0
        %628 = vmatpush1.bf16.msra.mxu0 %v619
        %629 = vmatprep.subr.bf16.mxu0 0
        %630 = vmatpush1.bf16.msra.mxu0 0
        %631 = vmatprep.subr.bf16.mxu0 0
        %632 = vmatpush1.bf16.msra.mxu0 0
        %633 = vmatprep.subr.bf16.mxu0 0
        %634 = vmatpush1.bf16.msra.mxu0 0
        %635 = vmatprep.subr.bf16.mxu0 0
        %636 = vmatpush1.bf16.msra.mxu0 0
        %637 = vmatprep.subr.bf16.mxu0 0
        %638 = vmatpush1.bf16.msra.mxu0 0
        %639 = vmatprep.subr.bf16.mxu0 0
        %640 = vmatpush1.bf16.msra.mxu0 0
        %641 = vmatprep.subr.bf16.mxu0 0
        %642 = vmatpush1.bf16.msra.mxu0 0
        %643 = vmatprep.subr.bf16.mxu0 0
        %644 = vmatpush1.bf16.msra.mxu0 0
        %645 = vmatprep.subr.bf16.mxu0 0
        %646 = vmatpush1.bf16.msra.mxu0 0
        %647 = vmatprep.subr.bf16.mxu0 0
        %648 = vmatpush1.bf16.msra.mxu0 0
        %649 = vmatprep.subr.bf16.mxu0 0
        %650 = vmatpush1.bf16.msra.mxu0 0
        %651 = vmatprep.subr.bf16.mxu0 0
        %652 = vmatpush1.bf16.msra.mxu0 0
        %653 = vmatprep.subr.bf16.mxu0 0
        %654 = vmatpush1.bf16.msra.mxu0 0
        %655 = vmatprep.subr.bf16.mxu0 0
        %656 = vmatpush1.bf16.msra.mxu0 0
        %657 = vmatprep.mubr.bf16.mxu0 0
        %658 = vmatmul.mubr.bf16.gmra.mrb[0].mxu0 %v623
        %v659 = vpop.f32.mrb[0].mxu0
        %v660 = vadd.f32 0.0, %v659
        %v661 = vpop.f32.mrb[0].mxu0
        %v662 = vpop.f32.mrb[0].mxu0
        %v663 = vpop.f32.mrb[0].mxu0
        %664 = vdwg.mxu0
        %v665 = vadd.f32 %v590, %v660
        %s666 = scalar_lea.vmem [#allocation2], 8
        %v667 = vld [vmem:[%s666] sm:$0x3]
        %v668 = vld [vmem:[%s666 + $0x4] sm:$0x3]
        %v671 = vcombine.low %v667, %v668
        %v673 = vunpack.c.l.s4 1983009808
        %v674 = vunpack.c.0.s8 %v673
        %v675 = vlaneseq
        %v676 = vshrl.u32 %v675, 7
        %v677 = vsub.s32 %v674, %v676
        %v678 = vrot.slane %v671, %v677
        %v680 = vpack.c.bf16 %v678, %v678
        %s681 = scalar_lea.vmem [#allocation6], 96
        %v682 = vld [vmem:[%s681] sm:$0xf]
        %v683 = vld [vmem:[%s681 + $0x4] sm:$0xf]
        %v684 = vld [vmem:[%s681 + $0x8] sm:$0xf]
        %v685 = vld [vmem:[%s681 + $0xc] sm:$0xf]
        %v690 = vunpack.c.l.b16 %v682
        %v691 = vunpack.c.l.b16 %v683
        %v692 = vunpack.c.l.b16 %v684
        %v693 = vunpack.c.l.b16 %v685
        %v694 = vpack.c.b16 %v691, %v690
        %v695 = vpack.c.b16 %v693, %v692
        %v699 = vsel %vm267, %v680, 0
        %701 = vmatprep.subr.bf16.mxu0 0
        %702 = vmatpush1.bf16.msra.mxu0 %v694
        %703 = vmatprep.subr.bf16.mxu0 0
        %704 = vmatpush1.bf16.msra.mxu0 %v695
        %705 = vmatprep.subr.bf16.mxu0 0
        %706 = vmatpush1.bf16.msra.mxu0 0
        %707 = vmatprep.subr.bf16.mxu0 0
        %708 = vmatpush1.bf16.msra.mxu0 0
        %709 = vmatprep.subr.bf16.mxu0 0
        %710 = vmatpush1.bf16.msra.mxu0 0
        %711 = vmatprep.subr.bf16.mxu0 0
        %712 = vmatpush1.bf16.msra.mxu0 0
        %713 = vmatprep.subr.bf16.mxu0 0
        %714 = vmatpush1.bf16.msra.mxu0 0
        %715 = vmatprep.subr.bf16.mxu0 0
        %716 = vmatpush1.bf16.msra.mxu0 0
        %717 = vmatprep.subr.bf16.mxu0 0
        %718 = vmatpush1.bf16.msra.mxu0 0
        %719 = vmatprep.subr.bf16.mxu0 0
        %720 = vmatpush1.bf16.msra.mxu0 0
        %721 = vmatprep.subr.bf16.mxu0 0
        %722 = vmatpush1.bf16.msra.mxu0 0
        %723 = vmatprep.subr.bf16.mxu0 0
        %724 = vmatpush1.bf16.msra.mxu0 0
        %725 = vmatprep.subr.bf16.mxu0 0
        %726 = vmatpush1.bf16.msra.mxu0 0
        %727 = vmatprep.subr.bf16.mxu0 0
        %728 = vmatpush1.bf16.msra.mxu0 0
        %729 = vmatprep.subr.bf16.mxu0 0
        %730 = vmatpush1.bf16.msra.mxu0 0
        %731 = vmatprep.subr.bf16.mxu0 0
        %732 = vmatpush1.bf16.msra.mxu0 0
        %733 = vmatprep.mubr.bf16.mxu0 0
        %734 = vmatmul.mubr.bf16.gmra.mrb[0].mxu0 %v699
        %v735 = vpop.f32.mrb[0].mxu0
        %v736 = vadd.f32 0.0, %v735
        %v737 = vpop.f32.mrb[0].mxu0
        %v738 = vpop.f32.mrb[0].mxu0
        %v739 = vpop.f32.mrb[0].mxu0
        %740 = vdwg.mxu0
        %v741 = vadd.f32 %v665, %v736
        %v742 = vld [vmem:[%s666 + $0x1] sm:$0x3]
        %v743 = vld [vmem:[%s666 + $0x5] sm:$0x3]
        %v746 = vcombine.low %v742, %v743
        %v748 = vunpack.c.l.s4 1983009808
        %v749 = vunpack.c.0.s8 %v748
        %v750 = vlaneseq
        %v751 = vshrl.u32 %v750, 7
        %v752 = vsub.s32 %v749, %v751
        %v753 = vrot.slane %v746, %v752
        %v755 = vpack.c.bf16 %v753, %v753
        %s756 = scalar_lea.vmem [#allocation6], 112
        %v757 = vld [vmem:[%s756] sm:$0xf]
        %v758 = vld [vmem:[%s756 + $0x4] sm:$0xf]
        %v759 = vld [vmem:[%s756 + $0x8] sm:$0xf]
        %v760 = vld [vmem:[%s756 + $0xc] sm:$0xf]
        %v765 = vunpack.c.l.b16 %v757
        %v766 = vunpack.c.l.b16 %v758
        %v767 = vunpack.c.l.b16 %v759
        %v768 = vunpack.c.l.b16 %v760
        %v769 = vpack.c.b16 %v766, %v765
        %v770 = vpack.c.b16 %v768, %v767
        %v774 = vsel %vm267, %v755, 0
        %776 = vmatprep.subr.bf16.mxu0 0
        %777 = vmatpush1.bf16.msra.mxu0 %v769
        %778 = vmatprep.subr.bf16.mxu0 0
        %779 = vmatpush1.bf16.msra.mxu0 %v770
        %780 = vmatprep.subr.bf16.mxu0 0
        %781 = vmatpush1.bf16.msra.mxu0 0
        %782 = vmatprep.subr.bf16.mxu0 0
        %783 = vmatpush1.bf16.msra.mxu0 0
        %784 = vmatprep.subr.bf16.mxu0 0
        %785 = vmatpush1.bf16.msra.mxu0 0
        %786 = vmatprep.subr.bf16.mxu0 0
        %787 = vmatpush1.bf16.msra.mxu0 0
        %788 = vmatprep.subr.bf16.mxu0 0
        %789 = vmatpush1.bf16.msra.mxu0 0
        %790 = vmatprep.subr.bf16.mxu0 0
        %791 = vmatpush1.bf16.msra.mxu0 0
        %792 = vmatprep.subr.bf16.mxu0 0
        %793 = vmatpush1.bf16.msra.mxu0 0
        %794 = vmatprep.subr.bf16.mxu0 0
        %795 = vmatpush1.bf16.msra.mxu0 0
        %796 = vmatprep.subr.bf16.mxu0 0
        %797 = vmatpush1.bf16.msra.mxu0 0
        %798 = vmatprep.subr.bf16.mxu0 0
        %799 = vmatpush1.bf16.msra.mxu0 0
        %800 = vmatprep.subr.bf16.mxu0 0
        %801 = vmatpush1.bf16.msra.mxu0 0
        %802 = vmatprep.subr.bf16.mxu0 0
        %803 = vmatpush1.bf16.msra.mxu0 0
        %804 = vmatprep.subr.bf16.mxu0 0
        %805 = vmatpush1.bf16.msra.mxu0 0
        %806 = vmatprep.subr.bf16.mxu0 0
        %807 = vmatpush1.bf16.msra.mxu0 0
        %808 = vmatprep.mubr.bf16.mxu0 0
        %809 = vmatmul.mubr.bf16.gmra.mrb[0].mxu0 %v774
        %v810 = vpop.f32.mrb[0].mxu0
        %v811 = vadd.f32 0.0, %v810
        %v812 = vpop.f32.mrb[0].mxu0
        %v813 = vpop.f32.mrb[0].mxu0
        %v814 = vpop.f32.mrb[0].mxu0
        %815 = vdwg.mxu0
        %v816 = vadd.f32 %v741, %v811
        %v817 = vld [vmem:[%s666 + $0x2] sm:$0x3]
        %v818 = vld [vmem:[%s666 + $0x6] sm:$0x3]
        %v821 = vcombine.low %v817, %v818
        %v823 = vunpack.c.l.s4 1983009808
        %v824 = vunpack.c.0.s8 %v823
        %v825 = vlaneseq
        %v826 = vshrl.u32 %v825, 7
        %v827 = vsub.s32 %v824, %v826
        %v828 = vrot.slane %v821, %v827
        %v830 = vpack.c.bf16 %v828, %v828
        %s831 = scalar_lea.vmem [#allocation6], 128
        %v832 = vld [vmem:[%s831] sm:$0xf]
        %v833 = vld [vmem:[%s831 + $0x4] sm:$0xf]
        %v834 = vld [vmem:[%s831 + $0x8] sm:$0xf]
        %v835 = vld [vmem:[%s831 + $0xc] sm:$0xf]
        %v840 = vunpack.c.l.b16 %v832
        %v841 = vunpack.c.l.b16 %v833
        %v842 = vunpack.c.l.b16 %v834
        %v843 = vunpack.c.l.b16 %v835
        %v844 = vpack.c.b16 %v841, %v840
        %v845 = vpack.c.b16 %v843, %v842
        %v849 = vsel %vm267, %v830, 0
        %851 = vmatprep.subr.bf16.mxu0 0
        %852 = vmatpush1.bf16.msra.mxu0 %v844
        %853 = vmatprep.subr.bf16.mxu0 0
        %854 = vmatpush1.bf16.msra.mxu0 %v845
        %855 = vmatprep.subr.bf16.mxu0 0
        %856 = vmatpush1.bf16.msra.mxu0 0
        %857 = vmatprep.subr.bf16.mxu0 0
        %858 = vmatpush1.bf16.msra.mxu0 0
        %859 = vmatprep.subr.bf16.mxu0 0
        %860 = vmatpush1.bf16.msra.mxu0 0
        %861 = vmatprep.subr.bf16.mxu0 0
        %862 = vmatpush1.bf16.msra.mxu0 0
        %863 = vmatprep.subr.bf16.mxu0 0
        %864 = vmatpush1.bf16.msra.mxu0 0
        %865 = vmatprep.subr.bf16.mxu0 0
        %866 = vmatpush1.bf16.msra.mxu0 0
        %867 = vmatprep.subr.bf16.mxu0 0
        %868 = vmatpush1.bf16.msra.mxu0 0
        %869 = vmatprep.subr.bf16.mxu0 0
        %870 = vmatpush1.bf16.msra.mxu0 0
        %871 = vmatprep.subr.bf16.mxu0 0
        %872 = vmatpush1.bf16.msra.mxu0 0
        %873 = vmatprep.subr.bf16.mxu0 0
        %874 = vmatpush1.bf16.msra.mxu0 0
        %875 = vmatprep.subr.bf16.mxu0 0
        %876 = vmatpush1.bf16.msra.mxu0 0
        %877 = vmatprep.subr.bf16.mxu0 0
        %878 = vmatpush1.bf16.msra.mxu0 0
        %879 = vmatprep.subr.bf16.mxu0 0
        %880 = vmatpush1.bf16.msra.mxu0 0
        %881 = vmatprep.subr.bf16.mxu0 0
        %882 = vmatpush1.bf16.msra.mxu0 0
        %883 = vmatprep.mubr.bf16.mxu0 0
        %884 = vmatmul.mubr.bf16.gmra.mrb[0].mxu0 %v849
        %v885 = vpop.f32.mrb[0].mxu0
        %v886 = vadd.f32 0.0, %v885
        %v887 = vpop.f32.mrb[0].mxu0
        %v888 = vpop.f32.mrb[0].mxu0
        %v889 = vpop.f32.mrb[0].mxu0
        %890 = vdwg.mxu0
        %v891 = vadd.f32 %v816, %v886
        %v892 = vld [vmem:[%s2] sm:$0x1]
        %v894 = vlaneseq
        %v895 = vshrl.u32 %v894, 7
        %v896 = vsub.s32 0, %v895
        %v897 = vrot.slane %v892, %v896
        %v899 = vadd.f32 %v891, %v897
        %v900 = vmax.f32 %v899, 0.0
        %v903 = vunpack.c.l.s4 1983009808
        %v904 = vunpack.c.0.s8 %v903
        %v905 = vlaneseq
        %v906 = vshrl.u32 %v905, 7
        %v907 = vsub.s32 %v904, %v906
        %v908 = vrot.slane %v900, %v907
        %v909 = vcombine.high %v908, %v908
        %912 = vst.msk [vmem:[%s203] sm:$0x3] %vm215, %v908
        %913 = vst.msk [vmem:[%s203 + $0x2] sm:$0x3] %vm215, %v909
        %s914 = sand.u32 %s97, 1
        %s915 = scalar_lea.sflag [#allocation5], %s914
        %s916 = sand.u32 %s97, 1
        %s917 = smul.addr %s916, 4
        %s918 = scalar_lea.vmem [#allocation8], %s917
        // Predicated region
        $region41: #{tpu_custom_call.1} parent=31 // pred_check
          %p919 = pneg %p107
        $region42: #{tpu_custom_call.1} parent=31 // pred_check_branch
          %921 = sbr.rel (%p919) target = $region44
        $region43: #{tpu_custom_call.1} parent=31 // pred_region
          %s923 = ssub.s32 64, 64
          %924 = vsyncadd %s915, %s923
          %s925 = smul.addr %s21, 2
          %s926 = smul.addr %s925, 32
          %s927 = scalar_lea.hbm %s3, %s926
          %s928 = sshll.u32 %s918, 4
          %s929 = int_to_ptr.vmem [resolvable:$true] %s928
          %934 = dma.vmem_to_hbm [thread:$0]  %s929, 64, %s927, %s915, 32, 32, 2
        $region44: #{tpu_custom_call.1} parent=31 // pred_fallthru
          _
      $region32: #{tpu_custom_call.1} parent=5 // pred_fallthru
        _
      %p935 = scmp.le.s32.totalorder 2, %s16
      // Predicated region
      $region45: #{tpu_custom_call.1} parent=5 // pred_check
        %p936 = pneg %p935
      $region46: #{tpu_custom_call.1} parent=5 // pred_check_branch
        %938 = sbr.rel (%p936) target = $region48
      $region47: #{tpu_custom_call.1} parent=5 // pred_region
        %s939 = ssub.s32 %s16, 2
        // Predicated region
        $region49: #{tpu_custom_call.1} parent=47 // pred_check
          %p940 = pneg %p113
        $region50: #{tpu_custom_call.1} parent=47 // pred_check_branch
          %942 = sbr.rel (%p940) target = $region52
        $region51: #{tpu_custom_call.1} parent=47 // pred_region
          %s943 = sand.u32 %s98, 1
          %s944 = scalar_lea.sflag [#allocation5], %s943
          %s945 = sand.u32 %s98, 1
          %s946 = smul.addr %s945, 4
          %s947 = scalar_lea.vmem [#allocation8], %s946
          %948 = dma.done %s944, 64
        $region52: #{tpu_custom_call.1} parent=47 // pred_fallthru
          _
      $region48: #{tpu_custom_call.1} parent=5 // pred_fallthru
        _
    $region6: #{tpu_custom_call.1} parent=1 // loop_footer
      %s20 = sadd.s32 1, %s16
    $region7: #{tpu_custom_call.1} parent=1 // loop_footer_branch
      %15 = sbr.rel target = $region3
    $region8: #{tpu_custom_call.1} parent=1 // loop_exit
      _
    %949 = vsyncpa [#allocation4], 1
    %s950 = scalar_lea.sflag [#allocation4], 1
    %951 = vsyncpa %s950, 1
    %952 = vsyncpa [#allocation7], 1
    %953 = vsyncpa [#allocation5], 1
    %s954 = scalar_lea.sflag [#allocation5], 1
    %955 = vsyncpa %s954, 1

</llo_original>
